<compile_context>
chip_gen: v7x
topology: tpu7x:2x2x1
jax: 0.10.0
libtpu: 0.0.40
codegen_flags: <defaults>
</compile_context>

<pallas_src>
import functools
import math

import jax
import jax.numpy as jnp
import numpy as np
from jax import lax
from jax.experimental import pallas as pl
from jax.experimental.pallas import tpu as pltpu


# ----------------------------------------------------------------------------
# Pallas kernel (single program, both streams, all batches).
#   x_ref  : (2, B, C, N) f32   — stream 0 = left, 1 = right, channel-major
#   w_ref  : (4C, C)      f32   — rows [Wq^T/sqrt(C); Wk^T; Wv^T; Wo^T]
#   ln_ref : (C, 4)       f32   — columns [g1, b1, g2, b2]
#   out_ref: (2, B, C, N) f32
# ----------------------------------------------------------------------------
def _fusion_kernel(x_ref, w_ref, ln_ref, out_ref, *, mxu_dtype):
    S, B, C, N = x_ref.shape
    BN = B * N
    eps = 1e-5

    w = w_ref[...]
    w_qkv = w[0:3 * C, :]                 # fused [Wq^T (scaled); Wk^T; Wv^T]
    w_o = w[3 * C:4 * C, :]
    lnp = ln_ref[...]
    gammas = (lnp[:, 0:1], lnp[:, 2:3])   # (C, 1) per stream
    betas = (lnp[:, 1:2], lnp[:, 3:4])

    def layer_norm(xs, g, b):             # xs: (C, B*N); normalize channels
        mu = jnp.mean(xs, axis=0, keepdims=True)
        xc = xs - mu
        var = jnp.mean(xc * xc, axis=0, keepdims=True)
        return xc * lax.rsqrt(var + eps) * g + b

    # Raw inputs, batch-concatenated along lanes: raw[s] is (C, B*N).
    raw = [jnp.concatenate([x_ref[s, b] for b in range(B)], axis=1)
           for s in range(S)]

    # Layer norms (computed once, shared by both streams' Q/K/V needs) and a
    # single fused Q/K/V projection over both streams and all batches.
    xln = [layer_norm(raw[s], gammas[s], betas[s]) for s in range(S)]
    xln_all = jnp.concatenate(xln, axis=1)                       # (C, S*B*N)
    qkv = jnp.dot(w_qkv, xln_all,
                  preferred_element_type=jnp.float32)            # (3C, S*B*N)
    q_all = qkv[0:C, :]                   # already scaled by 1/sqrt(C)
    k_all = qkv[C:2 * C, :]
    v_all = qkv[2 * C:3 * C, :]

    def lane_blk(mat, s, b):              # (C, N) lane-aligned slice
        off = s * BN + b * N
        return mat[:, off:off + N]

    # Cross attention per stream: Q/V from own stream, K from the other.
    o_parts = []
    for s in range(S):
        scores = []
        for b in range(B):
            q = lane_blk(q_all, s, b).astype(mxu_dtype)
            k = lane_blk(k_all, 1 - s, b).astype(mxu_dtype)
            # a[n, m] = sum_c Q[n, c] * K[m, c]
            scores.append(lax.dot_general(
                q, k, (((0,), (0,)), ((), ())),
                preferred_element_type=jnp.float32))             # (N, N)

        # Softmax over the *batch* axis.
        if B == 2:
            # Sigmoid form: one exp + one reciprocal on a single (N, N) tile.
            d = jnp.clip(scores[1] - scores[0], -30.0, 30.0)
            e = jnp.exp(d)
            denom = 1.0 + e
            inv = pl.reciprocal(denom, approx=True)
            inv = inv * (2.0 - denom * inv)      # one Newton refinement step
            probs = [inv, 1.0 - inv]
        else:
            m = scores[0]
            for b in range(1, B):
                m = jnp.maximum(m, scores[b])
            exps = [jnp.exp(a - m) for a in scores]
            denom = exps[0]
            for b in range(1, B):
                denom = denom + exps[b]
            inv = pl.reciprocal(denom, approx=True)
            inv = inv * (2.0 - denom * inv)
            probs = [e * inv for e in exps]

        for b in range(B):
            v = lane_blk(v_all, s, b).astype(mxu_dtype)
            p = probs[b].astype(mxu_dtype)
            # o^T[c, n] = sum_m V^T[c, m] * P[n, m]   (contraction over m = N)
            o_parts.append(lax.dot_general(
                v, p, (((1,), (1,)), ((), ())),
                preferred_element_type=jnp.float32))             # (C, N)

    # One output projection for all streams/batches, then residual + store.
    o_all = jnp.concatenate(o_parts, axis=1)                     # (C, S*B*N)
    y_all = jnp.dot(w_o, o_all, preferred_element_type=jnp.float32)

    for s in range(S):
        for b in range(B):
            y = lane_blk(y_all, s, b) + raw[s][:, b * N:(b + 1) * N]
            out_ref[s, b] = y.astype(out_ref.dtype)              # lane-dense


# ----------------------------------------------------------------------------
# Wrapper: pure reshapes + one stack (layout plumbing only), one pallas_call.
# ----------------------------------------------------------------------------
def fusion_forward(x_l, x_r, fused, *, mxu_dtype=jnp.bfloat16):
    B, C, H, W = x_l.shape
    N = H * W
    # NCHW -> (B, C, N) is a free reshape; stacking the streams gives a single
    # activation slab (one input DMA instead of two).
    x = jnp.stack([x_l.reshape(B, C, N), x_r.reshape(B, C, N)],
                  axis=0).astype(jnp.float32)

    kernel = functools.partial(_fusion_kernel, mxu_dtype=mxu_dtype)
    out = pl.pallas_call(
        kernel,
        out_shape=jax.ShapeDtypeStruct((2, B, C, N), jnp.float32),
        grid=(1,),
        in_specs=[
            pl.BlockSpec((2, B, C, N), lambda i: (0, 0, 0, 0)),   # activations
            pl.BlockSpec((4 * C, C), lambda i: (0, 0)),           # weight slab
            pl.BlockSpec((C, 4), lambda i: (0, 0)),               # LN slab
        ],
        out_specs=pl.BlockSpec((2, B, C, N), lambda i: (0, 0, 0, 0)),
        compiler_params=pltpu.CompilerParams(
            dimension_semantics=("arbitrary",)),
    )(x, fused["w_all"], fused["ln_all"])

    # (B, C, N) slabs reshape straight back to NCHW: no transpose needed.
    return out[0].reshape(B, C, H, W), out[1].reshape(B, C, H, W)


# ----------------------------------------------------------------------------
# One-time parameter prep (outside the per-call path): transpose to
# channel-major, fold 1/sqrt(C) into Wq, pack everything into two slabs.
# ----------------------------------------------------------------------------
def fuse_params(params):
    C = params["Wq"].shape[0]
    scale = 1.0 / math.sqrt(C)
    w_all = jnp.concatenate(
        [params["Wq"].T * scale, params["Wk"].T, params["Wv"].T,
         params["Wo"].T], axis=0).astype(jnp.float32)            # (4C, C)
    ln_all = jnp.stack(
        [params["ln1_g"], params["ln1_b"], params["ln2_g"], params["ln2_b"]],
        axis=1).astype(jnp.float32)                              # (C, 4)
    return {"w_all": w_all, "ln_all": ln_all}


# ----------------------------------------------------------------------------
# Pure-JAX reference (mirrors the PyTorch forward exactly) for verification.
# ----------------------------------------------------------------------------
def fusion_ref(x_l, x_r, params):
    B, C, H, W = x_l.shape
    N = H * W
    xl = jnp.transpose(x_l.reshape(B, C, N), (0, 2, 1))
    xr = jnp.transpose(x_r.reshape(B, C, N), (0, 2, 1))

    def ln(x, g, b):
        mu = jnp.mean(x, axis=-1, keepdims=True)
        var = jnp.mean((x - mu) ** 2, axis=-1, keepdims=True)
        return (x - mu) / jnp.sqrt(var + 1e-5) * g.reshape(1, 1, C) \
            + b.reshape(1, 1, C)

    xln_l = ln(xl, params["ln1_g"], params["ln1_b"])
    xln_r = ln(xr, params["ln2_g"], params["ln2_b"])

    q_l, q_r = xln_l @ params["Wq"], xln_r @ params["Wq"]
    k_l, k_r = xln_l @ params["Wk"], xln_r @ params["Wk"]
    v_l, v_r = xln_l @ params["Wv"], xln_r @ params["Wv"]

    a_l = jnp.einsum('bnc,bmc->bnm', q_l, k_r) / math.sqrt(C)
    a_r = jnp.einsum('bnc,bmc->bnm', q_r, k_l) / math.sqrt(C)
    p_l = jax.nn.softmax(a_l, axis=0)   # torch nn.Softmax(dim=None) -> dim 0
    p_r = jax.nn.softmax(a_r, axis=0)

    o_l = (jnp.einsum('bnm,bmc->bnc', p_l, v_l) @ params["Wo"]) + xl
    o_r = (jnp.einsum('bnm,bmc->bnc', p_r, v_r) @ params["Wo"]) + xr

    o_l = jnp.transpose(o_l, (0, 2, 1)).reshape(B, C, H, W)
    o_r = jnp.transpose(o_r, (0, 2, 1)).reshape(B, C, H, W)
    return o_l, o_r


def init_params(key, M):
    # kaiming_normal_(a=sqrt(5), fan_in=M, leaky_relu): gain = sqrt(2/(1+5))
    std = math.sqrt(2.0 / 6.0) / math.sqrt(M)
    kq, kk, kv, ko = jax.random.split(key, 4)
    return {
        "Wq": jax.random.normal(kq, (M, M), jnp.float32) * std,
        "Wk": jax.random.normal(kk, (M, M), jnp.float32) * std,
        "Wv": jax.random.normal(kv, (M, M), jnp.float32) * std,
        "Wo": jax.random.normal(ko, (M, M), jnp.float32) * std,
        "ln1_g": jnp.ones((M,), jnp.float32),
        "ln1_b": jnp.zeros((M,), jnp.float32),
        "ln2_g": jnp.ones((M,), jnp.float32),
        "ln2_b": jnp.zeros((M,), jnp.float32),
    }


if __name__ == "__main__":
    # M = C = 8 channels, H = W = 16 -> N = 256 (lane-dense last dim).
    B, C, H, W = 2, 8, 16, 16
    key = jax.random.PRNGKey(0)
    k_l, k_r, k_p = jax.random.split(key, 3)
    x_l = jax.random.normal(k_l, (B, C, H, W), jnp.float32)
    x_r = jax.random.normal(k_r, (B, C, H, W), jnp.float32)
    params = init_params(k_p, C)
    fused = fuse_params(params)          # one-time weight prep, outside jit

    fwd = jax.jit(fusion_forward)
    out_l, out_r = fwd(x_l, x_r, fused)
    jax.block_until_ready((out_l, out_r))

    ref_l, ref_r = fusion_ref(x_l, x_r, params)

    # The default (perf) config uses bf16 MXU operands with f32 accumulation
    # for the two (N, N) dots, so the elementwise tolerance reflects bf16
    # rounding through a 256-term contraction (max-abs error ~3e-2 at these
    # shapes); the softmax reciprocal itself is Newton-refined to ~f32
    # accuracy.  With mxu_dtype=jnp.float32 the kernel matches the reference
    # to ~1e-5.  An aggregate relative-L2 bound keeps the check meaningful.
    for got, ref in ((out_l, ref_l), (out_r, ref_r)):
        got_np, ref_np = np.asarray(got), np.asarray(ref)
        np.testing.assert_allclose(got_np, ref_np, rtol=5e-2, atol=1e-1)
        rel_l2 = np.linalg.norm(got_np - ref_np) / np.linalg.norm(ref_np)
        assert rel_l2 < 2e-2, f"relative L2 error too large: {rel_l2}"
    print("KERNEL_OK")
</pallas_src>

<mosaic_0001>
module attributes {stable_mosaic.version = 11 : i64} {
  func.func @_fusion_kernel(%arg0: i32, %arg1: memref<2x2x8x256xf32, #tpu.memory_space<vmem>>, %arg2: memref<32x8xf32, #tpu.memory_space<vmem>>, %arg3: memref<8x4xf32, #tpu.memory_space<vmem>>, %arg4: memref<2x2x8x256xf32, #tpu.memory_space<vmem>>) attributes {dimension_semantics = [#tpu.dimension_semantics<arbitrary>], iteration_bounds = array<i64: 1>, scalar_prefetch = 0 : i64, scratch_operands = 0 : i64, tpu.core_type = #tpu.core_type<tc>, window_params = [{pipeline_mode = #tpu.pipeline_mode<synchronous>, transform_indices = @transform_0, window_bounds = array<i64: 2, 2, 8, 256>}, {pipeline_mode = #tpu.pipeline_mode<synchronous>, transform_indices = @transform_1, window_bounds = array<i64: 32, 8>}, {pipeline_mode = #tpu.pipeline_mode<synchronous>, transform_indices = @transform_2, window_bounds = array<i64: 8, 4>}, {pipeline_mode = #tpu.pipeline_mode<synchronous>, transform_indices = @transform_3, window_bounds = array<i64: 2, 2, 8, 256>}]} {
    %c0 = arith.constant 0 : index
    %c0_0 = arith.constant 0 : index
    %0 = vector.load %arg2[%c0, %c0_0] : memref<32x8xf32, #tpu.memory_space<vmem>>, vector<32x8xf32>
    %1 = vector.extract_strided_slice %0 {offsets = [0, 0], sizes = [24, 8], strides = [1, 1]} : vector<32x8xf32> to vector<24x8xf32>
    %2 = vector.extract_strided_slice %0 {offsets = [24, 0], sizes = [8, 8], strides = [1, 1]} : vector<32x8xf32> to vector<8x8xf32>
    %c0_1 = arith.constant 0 : index
    %c0_2 = arith.constant 0 : index
    %3 = vector.load %arg3[%c0_1, %c0_2] : memref<8x4xf32, #tpu.memory_space<vmem>>, vector<8x4xf32>
    %4 = vector.extract_strided_slice %3 {offsets = [0, 0], sizes = [8, 1], strides = [1, 1]} : vector<8x4xf32> to vector<8x1xf32>
    %5 = vector.extract_strided_slice %3 {offsets = [0, 2], sizes = [8, 1], strides = [1, 1]} : vector<8x4xf32> to vector<8x1xf32>
    %6 = vector.extract_strided_slice %3 {offsets = [0, 1], sizes = [8, 1], strides = [1, 1]} : vector<8x4xf32> to vector<8x1xf32>
    %7 = vector.extract_strided_slice %3 {offsets = [0, 3], sizes = [8, 1], strides = [1, 1]} : vector<8x4xf32> to vector<8x1xf32>
    %c0_3 = arith.constant 0 : index
    %c0_4 = arith.constant 0 : index
    %c0_5 = arith.constant 0 : index
    %c0_6 = arith.constant 0 : index
    %8 = vector.load %arg1[%c0_3, %c0_4, %c0_5, %c0_6] : memref<2x2x8x256xf32, #tpu.memory_space<vmem>>, vector<1x1x8x256xf32>
    %9 = vector.shape_cast %8 : vector<1x1x8x256xf32> to vector<8x256xf32>
    %c0_7 = arith.constant 0 : index
    %c1 = arith.constant 1 : index
    %c0_8 = arith.constant 0 : index
    %c0_9 = arith.constant 0 : index
    %10 = vector.load %arg1[%c0_7, %c1, %c0_8, %c0_9] : memref<2x2x8x256xf32, #tpu.memory_space<vmem>>, vector<1x1x8x256xf32>
    %11 = vector.shape_cast %10 : vector<1x1x8x256xf32> to vector<8x256xf32>
    %12 = tpu.concatenate %9, %11 in 1 : vector<8x256xf32>, vector<8x256xf32> -> vector<8x512xf32>
    %c1_10 = arith.constant 1 : index
    %c0_11 = arith.constant 0 : index
    %c0_12 = arith.constant 0 : index
    %c0_13 = arith.constant 0 : index
    %13 = vector.load %arg1[%c1_10, %c0_11, %c0_12, %c0_13] : memref<2x2x8x256xf32, #tpu.memory_space<vmem>>, vector<1x1x8x256xf32>
    %14 = vector.shape_cast %13 : vector<1x1x8x256xf32> to vector<8x256xf32>
    %c1_14 = arith.constant 1 : index
    %c1_15 = arith.constant 1 : index
    %c0_16 = arith.constant 0 : index
    %c0_17 = arith.constant 0 : index
    %15 = vector.load %arg1[%c1_14, %c1_15, %c0_16, %c0_17] : memref<2x2x8x256xf32, #tpu.memory_space<vmem>>, vector<1x1x8x256xf32>
    %16 = vector.shape_cast %15 : vector<1x1x8x256xf32> to vector<8x256xf32>
    %17 = tpu.concatenate %14, %16 in 1 : vector<8x256xf32>, vector<8x256xf32> -> vector<8x512xf32>
    %cst = arith.constant dense<0.000000e+00> : vector<512xf32>
    %18 = vector.multi_reduction <add>, %12, %cst [0] : vector<8x512xf32> to vector<512xf32>
    %19 = vector.shape_cast %18 : vector<512xf32> to vector<1x512xf32>
    %cst_18 = arith.constant 8.000000e+00 : f32
    %20 = vector.broadcast %cst_18 : f32 to vector<1x512xf32>
    %21 = arith.divf %19, %20 : vector<1x512xf32>
    %22 = vector.broadcast %21 : vector<1x512xf32> to vector<8x512xf32>
    %23 = arith.subf %12, %22 : vector<8x512xf32>
    %24 = arith.mulf %23, %23 : vector<8x512xf32>
    %cst_19 = arith.constant dense<0.000000e+00> : vector<512xf32>
    %25 = vector.multi_reduction <add>, %24, %cst_19 [0] : vector<8x512xf32> to vector<512xf32>
    %26 = vector.shape_cast %25 : vector<512xf32> to vector<1x512xf32>
    %cst_20 = arith.constant 8.000000e+00 : f32
    %27 = vector.broadcast %cst_20 : f32 to vector<1x512xf32>
    %28 = arith.divf %26, %27 : vector<1x512xf32>
    %cst_21 = arith.constant 9.99999974E-6 : f32
    %29 = vector.broadcast %cst_21 : f32 to vector<1x512xf32>
    %30 = arith.addf %28, %29 : vector<1x512xf32>
    %31 = math.rsqrt %30 : vector<1x512xf32>
    %32 = vector.broadcast %31 : vector<1x512xf32> to vector<8x512xf32>
    %33 = arith.mulf %23, %32 : vector<8x512xf32>
    %34 = vector.broadcast %4 : vector<8x1xf32> to vector<8x512xf32>
    %35 = arith.mulf %33, %34 : vector<8x512xf32>
    %36 = vector.broadcast %6 : vector<8x1xf32> to vector<8x512xf32>
    %37 = arith.addf %35, %36 : vector<8x512xf32>
    %cst_22 = arith.constant dense<0.000000e+00> : vector<512xf32>
    %38 = vector.multi_reduction <add>, %17, %cst_22 [0] : vector<8x512xf32> to vector<512xf32>
    %39 = vector.shape_cast %38 : vector<512xf32> to vector<1x512xf32>
    %cst_23 = arith.constant 8.000000e+00 : f32
    %40 = vector.broadcast %cst_23 : f32 to vector<1x512xf32>
    %41 = arith.divf %39, %40 : vector<1x512xf32>
    %42 = vector.broadcast %41 : vector<1x512xf32> to vector<8x512xf32>
    %43 = arith.subf %17, %42 : vector<8x512xf32>
    %44 = arith.mulf %43, %43 : vector<8x512xf32>
    %cst_24 = arith.constant dense<0.000000e+00> : vector<512xf32>
    %45 = vector.multi_reduction <add>, %44, %cst_24 [0] : vector<8x512xf32> to vector<512xf32>
    %46 = vector.shape_cast %45 : vector<512xf32> to vector<1x512xf32>
    %cst_25 = arith.constant 8.000000e+00 : f32
    %47 = vector.broadcast %cst_25 : f32 to vector<1x512xf32>
    %48 = arith.divf %46, %47 : vector<1x512xf32>
    %cst_26 = arith.constant 9.99999974E-6 : f32
    %49 = vector.broadcast %cst_26 : f32 to vector<1x512xf32>
    %50 = arith.addf %48, %49 : vector<1x512xf32>
    %51 = math.rsqrt %50 : vector<1x512xf32>
    %52 = vector.broadcast %51 : vector<1x512xf32> to vector<8x512xf32>
    %53 = arith.mulf %43, %52 : vector<8x512xf32>
    %54 = vector.broadcast %5 : vector<8x1xf32> to vector<8x512xf32>
    %55 = arith.mulf %53, %54 : vector<8x512xf32>
    %56 = vector.broadcast %7 : vector<8x1xf32> to vector<8x512xf32>
    %57 = arith.addf %55, %56 : vector<8x512xf32>
    %58 = tpu.concatenate %37, %57 in 1 : vector<8x512xf32>, vector<8x512xf32> -> vector<8x1024xf32>
    %cst_27 = arith.constant dense<0.000000e+00> : vector<24x1024xf32>
    %59 = tpu.matmul %1, %58, %cst_27 {dimension_numbers = #tpu.dot_dimension_numbers<[1], [0], [0], [1], [0, 0, 1, 1], [], []>} : vector<24x8xf32>, vector<8x1024xf32>, vector<24x1024xf32> -> vector<24x1024xf32>
    %60 = vector.extract_strided_slice %59 {offsets = [0, 0], sizes = [8, 1024], strides = [1, 1]} : vector<24x1024xf32> to vector<8x1024xf32>
    %61 = vector.extract_strided_slice %59 {offsets = [8, 0], sizes = [8, 1024], strides = [1, 1]} : vector<24x1024xf32> to vector<8x1024xf32>
    %62 = vector.extract_strided_slice %59 {offsets = [16, 0], sizes = [8, 1024], strides = [1, 1]} : vector<24x1024xf32> to vector<8x1024xf32>
    %63 = vector.extract_strided_slice %60 {offsets = [0, 0], sizes = [8, 256], strides = [1, 1]} : vector<8x1024xf32> to vector<8x256xf32>
    %64 = arith.truncf %63 : vector<8x256xf32> to vector<8x256xbf16>
    %65 = vector.extract_strided_slice %61 {offsets = [0, 512], sizes = [8, 256], strides = [1, 1]} : vector<8x1024xf32> to vector<8x256xf32>
    %66 = arith.truncf %65 : vector<8x256xf32> to vector<8x256xbf16>
    %cst_28 = arith.constant dense<0.000000e+00> : vector<256x256xf32>
    %67 = tpu.matmul %64, %66, %cst_28 {dimension_numbers = #tpu.dot_dimension_numbers<[0], [0], [1], [1], [0, 1, 1, 1], [], []>} : vector<8x256xbf16>, vector<8x256xbf16>, vector<256x256xf32> -> vector<256x256xf32>
    %68 = vector.extract_strided_slice %60 {offsets = [0, 256], sizes = [8, 256], strides = [1, 1]} : vector<8x1024xf32> to vector<8x256xf32>
    %69 = arith.truncf %68 : vector<8x256xf32> to vector<8x256xbf16>
    %70 = vector.extract_strided_slice %61 {offsets = [0, 768], sizes = [8, 256], strides = [1, 1]} : vector<8x1024xf32> to vector<8x256xf32>
    %71 = arith.truncf %70 : vector<8x256xf32> to vector<8x256xbf16>
    %cst_29 = arith.constant dense<0.000000e+00> : vector<256x256xf32>
    %72 = tpu.matmul %69, %71, %cst_29 {dimension_numbers = #tpu.dot_dimension_numbers<[0], [0], [1], [1], [0, 1, 1, 1], [], []>} : vector<8x256xbf16>, vector<8x256xbf16>, vector<256x256xf32> -> vector<256x256xf32>
    %73 = arith.subf %72, %67 : vector<256x256xf32>
    %cst_30 = arith.constant -3.000000e+01 : f32
    %cst_31 = arith.constant 3.000000e+01 : f32
    %74 = vector.broadcast %cst_30 : f32 to vector<256x256xf32>
    %75 = arith.maximumf %74, %73 : vector<256x256xf32>
    %76 = vector.broadcast %cst_31 : f32 to vector<256x256xf32>
    %77 = arith.minimumf %76, %75 : vector<256x256xf32>
    %78 = math.exp %77 : vector<256x256xf32>
    %cst_32 = arith.constant 1.000000e+00 : f32
    %79 = vector.broadcast %cst_32 : f32 to vector<256x256xf32>
    %80 = arith.addf %79, %78 : vector<256x256xf32>
    %81 = tpu.reciprocal %80 {approx = true} : vector<256x256xf32> -> vector<256x256xf32>
    %82 = arith.mulf %80, %81 : vector<256x256xf32>
    %cst_33 = arith.constant 2.000000e+00 : f32
    %83 = vector.broadcast %cst_33 : f32 to vector<256x256xf32>
    %84 = arith.subf %83, %82 : vector<256x256xf32>
    %85 = arith.mulf %81, %84 : vector<256x256xf32>
    %cst_34 = arith.constant 1.000000e+00 : f32
    %86 = vector.broadcast %cst_34 : f32 to vector<256x256xf32>
    %87 = arith.subf %86, %85 : vector<256x256xf32>
    %88 = vector.extract_strided_slice %62 {offsets = [0, 0], sizes = [8, 256], strides = [1, 1]} : vector<8x1024xf32> to vector<8x256xf32>
    %89 = arith.truncf %88 : vector<8x256xf32> to vector<8x256xbf16>
    %90 = arith.truncf %85 : vector<256x256xf32> to vector<256x256xbf16>
    %cst_35 = arith.constant dense<0.000000e+00> : vector<8x256xf32>
    %91 = tpu.matmul %89, %90, %cst_35 {dimension_numbers = #tpu.dot_dimension_numbers<[1], [1], [0], [0], [0, 0, 1, 0], [], []>} : vector<8x256xbf16>, vector<256x256xbf16>, vector<8x256xf32> -> vector<8x256xf32>
    %92 = vector.extract_strided_slice %62 {offsets = [0, 256], sizes = [8, 256], strides = [1, 1]} : vector<8x1024xf32> to vector<8x256xf32>
    %93 = arith.truncf %92 : vector<8x256xf32> to vector<8x256xbf16>
    %94 = arith.truncf %87 : vector<256x256xf32> to vector<256x256xbf16>
    %cst_36 = arith.constant dense<0.000000e+00> : vector<8x256xf32>
    %95 = tpu.matmul %93, %94, %cst_36 {dimension_numbers = #tpu.dot_dimension_numbers<[1], [1], [0], [0], [0, 0, 1, 0], [], []>} : vector<8x256xbf16>, vector<256x256xbf16>, vector<8x256xf32> -> vector<8x256xf32>
    %96 = vector.extract_strided_slice %60 {offsets = [0, 512], sizes = [8, 256], strides = [1, 1]} : vector<8x1024xf32> to vector<8x256xf32>
    %97 = arith.truncf %96 : vector<8x256xf32> to vector<8x256xbf16>
    %98 = vector.extract_strided_slice %61 {offsets = [0, 0], sizes = [8, 256], strides = [1, 1]} : vector<8x1024xf32> to vector<8x256xf32>
    %99 = arith.truncf %98 : vector<8x256xf32> to vector<8x256xbf16>
    %cst_37 = arith.constant dense<0.000000e+00> : vector<256x256xf32>
    %100 = tpu.matmul %97, %99, %cst_37 {dimension_numbers = #tpu.dot_dimension_numbers<[0], [0], [1], [1], [0, 1, 1, 1], [], []>} : vector<8x256xbf16>, vector<8x256xbf16>, vector<256x256xf32> -> vector<256x256xf32>
    %101 = vector.extract_strided_slice %60 {offsets = [0, 768], sizes = [8, 256], strides = [1, 1]} : vector<8x1024xf32> to vector<8x256xf32>
    %102 = arith.truncf %101 : vector<8x256xf32> to vector<8x256xbf16>
    %103 = vector.extract_strided_slice %61 {offsets = [0, 256], sizes = [8, 256], strides = [1, 1]} : vector<8x1024xf32> to vector<8x256xf32>
    %104 = arith.truncf %103 : vector<8x256xf32> to vector<8x256xbf16>
    %cst_38 = arith.constant dense<0.000000e+00> : vector<256x256xf32>
    %105 = tpu.matmul %102, %104, %cst_38 {dimension_numbers = #tpu.dot_dimension_numbers<[0], [0], [1], [1], [0, 1, 1, 1], [], []>} : vector<8x256xbf16>, vector<8x256xbf16>, vector<256x256xf32> -> vector<256x256xf32>
    %106 = arith.subf %105, %100 : vector<256x256xf32>
    %cst_39 = arith.constant -3.000000e+01 : f32
    %cst_40 = arith.constant 3.000000e+01 : f32
    %107 = vector.broadcast %cst_39 : f32 to vector<256x256xf32>
    %108 = arith.maximumf %107, %106 : vector<256x256xf32>
    %109 = vector.broadcast %cst_40 : f32 to vector<256x256xf32>
    %110 = arith.minimumf %109, %108 : vector<256x256xf32>
    %111 = math.exp %110 : vector<256x256xf32>
    %cst_41 = arith.constant 1.000000e+00 : f32
    %112 = vector.broadcast %cst_41 : f32 to vector<256x256xf32>
    %113 = arith.addf %112, %111 : vector<256x256xf32>
    %114 = tpu.reciprocal %113 {approx = true} : vector<256x256xf32> -> vector<256x256xf32>
    %115 = arith.mulf %113, %114 : vector<256x256xf32>
    %cst_42 = arith.constant 2.000000e+00 : f32
    %116 = vector.broadcast %cst_42 : f32 to vector<256x256xf32>
    %117 = arith.subf %116, %115 : vector<256x256xf32>
    %118 = arith.mulf %114, %117 : vector<256x256xf32>
    %cst_43 = arith.constant 1.000000e+00 : f32
    %119 = vector.broadcast %cst_43 : f32 to vector<256x256xf32>
    %120 = arith.subf %119, %118 : vector<256x256xf32>
    %121 = vector.extract_strided_slice %62 {offsets = [0, 512], sizes = [8, 256], strides = [1, 1]} : vector<8x1024xf32> to vector<8x256xf32>
    %122 = arith.truncf %121 : vector<8x256xf32> to vector<8x256xbf16>
    %123 = arith.truncf %118 : vector<256x256xf32> to vector<256x256xbf16>
    %cst_44 = arith.constant dense<0.000000e+00> : vector<8x256xf32>
    %124 = tpu.matmul %122, %123, %cst_44 {dimension_numbers = #tpu.dot_dimension_numbers<[1], [1], [0], [0], [0, 0, 1, 0], [], []>} : vector<8x256xbf16>, vector<256x256xbf16>, vector<8x256xf32> -> vector<8x256xf32>
    %125 = vector.extract_strided_slice %62 {offsets = [0, 768], sizes = [8, 256], strides = [1, 1]} : vector<8x1024xf32> to vector<8x256xf32>
    %126 = arith.truncf %125 : vector<8x256xf32> to vector<8x256xbf16>
    %127 = arith.truncf %120 : vector<256x256xf32> to vector<256x256xbf16>
    %cst_45 = arith.constant dense<0.000000e+00> : vector<8x256xf32>
    %128 = tpu.matmul %126, %127, %cst_45 {dimension_numbers = #tpu.dot_dimension_numbers<[1], [1], [0], [0], [0, 0, 1, 0], [], []>} : vector<8x256xbf16>, vector<256x256xbf16>, vector<8x256xf32> -> vector<8x256xf32>
    %129 = tpu.concatenate %91, %95, %124, %128 in 1 : vector<8x256xf32>, vector<8x256xf32>, vector<8x256xf32>, vector<8x256xf32> -> vector<8x1024xf32>
    %cst_46 = arith.constant dense<0.000000e+00> : vector<8x1024xf32>
    %130 = tpu.matmul %2, %129, %cst_46 {dimension_numbers = #tpu.dot_dimension_numbers<[1], [0], [0], [1], [0, 0, 1, 1], [], []>} : vector<8x8xf32>, vector<8x1024xf32>, vector<8x1024xf32> -> vector<8x1024xf32>
    %131 = vector.extract_strided_slice %130 {offsets = [0, 0], sizes = [8, 256], strides = [1, 1]} : vector<8x1024xf32> to vector<8x256xf32>
    %132 = vector.extract_strided_slice %12 {offsets = [0, 0], sizes = [8, 256], strides = [1, 1]} : vector<8x512xf32> to vector<8x256xf32>
    %133 = arith.addf %131, %132 : vector<8x256xf32>
    %c0_47 = arith.constant 0 : index
    %c0_48 = arith.constant 0 : index
    %c0_49 = arith.constant 0 : index
    %c0_50 = arith.constant 0 : index
    %134 = vector.load %arg4[%c0_47, %c0_48, %c0_49, %c0_50] : memref<2x2x8x256xf32, #tpu.memory_space<vmem>>, vector<1x1x8x256xf32>
    %135 = vector.shape_cast %134 : vector<1x1x8x256xf32> to vector<8x256xf32>
    %136 = vector.shape_cast %133 : vector<8x256xf32> to vector<1x1x8x256xf32>
    tpu.vector_store %arg4[%c0_47, %c0_48, %c0_49, %c0_50], %136 {strides = array<i32>} : memref<2x2x8x256xf32, #tpu.memory_space<vmem>>, vector<1x1x8x256xf32>,
    %137 = vector.extract_strided_slice %130 {offsets = [0, 256], sizes = [8, 256], strides = [1, 1]} : vector<8x1024xf32> to vector<8x256xf32>
    %138 = vector.extract_strided_slice %12 {offsets = [0, 256], sizes = [8, 256], strides = [1, 1]} : vector<8x512xf32> to vector<8x256xf32>
    %139 = arith.addf %137, %138 : vector<8x256xf32>
    %c0_51 = arith.constant 0 : index
    %c1_52 = arith.constant 1 : index
    %c0_53 = arith.constant 0 : index
    %c0_54 = arith.constant 0 : index
    %140 = vector.load %arg4[%c0_51, %c1_52, %c0_53, %c0_54] : memref<2x2x8x256xf32, #tpu.memory_space<vmem>>, vector<1x1x8x256xf32>
    %141 = vector.shape_cast %140 : vector<1x1x8x256xf32> to vector<8x256xf32>
    %142 = vector.shape_cast %139 : vector<8x256xf32> to vector<1x1x8x256xf32>
    tpu.vector_store %arg4[%c0_51, %c1_52, %c0_53, %c0_54], %142 {strides = array<i32>} : memref<2x2x8x256xf32, #tpu.memory_space<vmem>>, vector<1x1x8x256xf32>,
    %143 = vector.extract_strided_slice %130 {offsets = [0, 512], sizes = [8, 256], strides = [1, 1]} : vector<8x1024xf32> to vector<8x256xf32>
    %144 = vector.extract_strided_slice %17 {offsets = [0, 0], sizes = [8, 256], strides = [1, 1]} : vector<8x512xf32> to vector<8x256xf32>
    %145 = arith.addf %143, %144 : vector<8x256xf32>
    %c1_55 = arith.constant 1 : index
    %c0_56 = arith.constant 0 : index
    %c0_57 = arith.constant 0 : index
    %c0_58 = arith.constant 0 : index
    %146 = vector.load %arg4[%c1_55, %c0_56, %c0_57, %c0_58] : memref<2x2x8x256xf32, #tpu.memory_space<vmem>>, vector<1x1x8x256xf32>
    %147 = vector.shape_cast %146 : vector<1x1x8x256xf32> to vector<8x256xf32>
    %148 = vector.shape_cast %145 : vector<8x256xf32> to vector<1x1x8x256xf32>
    tpu.vector_store %arg4[%c1_55, %c0_56, %c0_57, %c0_58], %148 {strides = array<i32>} : memref<2x2x8x256xf32, #tpu.memory_space<vmem>>, vector<1x1x8x256xf32>,
    %149 = vector.extract_strided_slice %130 {offsets = [0, 768], sizes = [8, 256], strides = [1, 1]} : vector<8x1024xf32> to vector<8x256xf32>
    %150 = vector.extract_strided_slice %17 {offsets = [0, 256], sizes = [8, 256], strides = [1, 1]} : vector<8x512xf32> to vector<8x256xf32>
    %151 = arith.addf %149, %150 : vector<8x256xf32>
    %c1_59 = arith.constant 1 : index
    %c1_60 = arith.constant 1 : index
    %c0_61 = arith.constant 0 : index
    %c0_62 = arith.constant 0 : index
    %152 = vector.load %arg4[%c1_59, %c1_60, %c0_61, %c0_62] : memref<2x2x8x256xf32, #tpu.memory_space<vmem>>, vector<1x1x8x256xf32>
    %153 = vector.shape_cast %152 : vector<1x1x8x256xf32> to vector<8x256xf32>
    %154 = vector.shape_cast %151 : vector<8x256xf32> to vector<1x1x8x256xf32>
    tpu.vector_store %arg4[%c1_59, %c1_60, %c0_61, %c0_62], %154 {strides = array<i32>} : memref<2x2x8x256xf32, #tpu.memory_space<vmem>>, vector<1x1x8x256xf32>,
    return
  }
  func.func @transform_0(%arg0: i32) -> (i32, i32, i32, i32) {
    %c0_i32 = arith.constant 0 : i32
    %c0_i32_0 = arith.constant 0 : i32
    %c0_i32_1 = arith.constant 0 : i32
    %c0_i32_2 = arith.constant 0 : i32
    %c0_i32_3 = arith.constant 0 : i32
    return %c0_i32, %c0_i32_0, %c0_i32_1, %c0_i32_2 : i32, i32, i32, i32
  }
  func.func @transform_1(%arg0: i32) -> (i32, i32) {
    %c0_i32 = arith.constant 0 : i32
    %c0_i32_0 = arith.constant 0 : i32
    %c0_i32_1 = arith.constant 0 : i32
    return %c0_i32, %c0_i32_0 : i32, i32
  }
  func.func @transform_2(%arg0: i32) -> (i32, i32) {
    %c0_i32 = arith.constant 0 : i32
    %c0_i32_0 = arith.constant 0 : i32
    %c0_i32_1 = arith.constant 0 : i32
    return %c0_i32, %c0_i32_0 : i32, i32
  }
  func.func @transform_3(%arg0: i32) -> (i32, i32, i32, i32) {
    %c0_i32 = arith.constant 0 : i32
    %c0_i32_0 = arith.constant 0 : i32
    %c0_i32_1 = arith.constant 0 : i32
    %c0_i32_2 = arith.constant 0 : i32
    %c0_i32_3 = arith.constant 0 : i32
    return %c0_i32, %c0_i32_0, %c0_i32_1, %c0_i32_2 : i32, i32, i32, i32
  }
}

</mosaic_0001>

<llo_original>
// kernel: squeeze.3
$region0: #{squeeze.3}
  %s0 = inlined_call_operand.vmem [shape: f32[1,2,8,256], index: 0, kind: input, shape index: {}]
  %s1 = inlined_call_operand.hbm [shape: f32[2,8,16,16], index: 1, kind: output, shape index: {}]
  $region1: #{squeeze.3} parent=0
    #allocation0 [shape = 'u8[131072]{0}', space=vmem, size = 0x20000, scoped, tag = 'operand span for operand 1']
    #allocation1 [shape = 's32[1]{0}', space=sflag, size = 0x4, scoped, tag = 'scoped memory for squeeze.3']
    %2 = vsyncpa [#allocation1], 0
    %v3 = vld [vmem:[%s0] sm:$0xff]
    %vm4 = vcmask 130048
    %5 = vst.msk [vmem:[#allocation0] ss:$16 sm:$0x3] %vm4, %v3
    %6 = vst.msk [vmem:[#allocation0] ss:$16 sm:$0xc] %vm4, %v3
    %7 = vst.msk [vmem:[#allocation0] ss:$16 sm:$0x30] %vm4, %v3
    %8 = vst.msk [vmem:[#allocation0] ss:$16 sm:$0xc0] %vm4, %v3
    %s9 = scalar_lea.vmem %s0, 8
    %v10 = vld [vmem:[%s9] sm:$0xff]
    %vm11 = vcmask 130048
    %s12 = scalar_lea.vmem [#allocation0], 8
    %13 = vst.msk [vmem:[%s12] ss:$16 sm:$0x3] %vm11, %v10
    %s14 = scalar_lea.vmem [#allocation0], 8
    %15 = vst.msk [vmem:[%s14] ss:$16 sm:$0xc] %vm11, %v10
    %s16 = scalar_lea.vmem [#allocation0], 8
    %17 = vst.msk [vmem:[%s16] ss:$16 sm:$0x30] %vm11, %v10
    %s18 = scalar_lea.vmem [#allocation0], 8
    %19 = vst.msk [vmem:[%s18] ss:$16 sm:$0xc0] %vm11, %v10
    %s20 = scalar_lea.vmem %s0, 16
    %v21 = vld [vmem:[%s20] sm:$0xff]
    %vm22 = vcmask 130048
    %s23 = scalar_lea.vmem [#allocation0], 128
    %24 = vst.msk [vmem:[%s23] ss:$16 sm:$0x3] %vm22, %v21
    %s25 = scalar_lea.vmem [#allocation0], 128
    %26 = vst.msk [vmem:[%s25] ss:$16 sm:$0xc] %vm22, %v21
    %s27 = scalar_lea.vmem [#allocation0], 128
    %28 = vst.msk [vmem:[%s27] ss:$16 sm:$0x30] %vm22, %v21
    %s29 = scalar_lea.vmem [#allocation0], 128
    %30 = vst.msk [vmem:[%s29] ss:$16 sm:$0xc0] %vm22, %v21
    %s31 = scalar_lea.vmem %s0, 24
    %v32 = vld [vmem:[%s31] sm:$0xff]
    %vm33 = vcmask 130048
    %s34 = scalar_lea.vmem [#allocation0], 136
    %35 = vst.msk [vmem:[%s34] ss:$16 sm:$0x3] %vm33, %v32
    %s36 = scalar_lea.vmem [#allocation0], 136
    %37 = vst.msk [vmem:[%s36] ss:$16 sm:$0xc] %vm33, %v32
    %s38 = scalar_lea.vmem [#allocation0], 136
    %39 = vst.msk [vmem:[%s38] ss:$16 sm:$0x30] %vm33, %v32
    %s40 = scalar_lea.vmem [#allocation0], 136
    %41 = vst.msk [vmem:[%s40] ss:$16 sm:$0xc0] %vm33, %v32
    %v42 = vld.sshfl [vmem:[%s0] sm:$0xff pattern:$0xb3a29180]
    %43 = vrot.lane.b32.xlu0 %v42, 112
    %v44 = vpop.permute.xlu0 %43
    %vm45 = vcmask 130048
    %s46 = scalar_lea.vmem [#allocation0], 1
    %47 = vst.msk [vmem:[%s46] ss:$8 sm:$0xf] %vm45, %v44
    %s48 = scalar_lea.vmem [#allocation0], 1
    %49 = vst.msk [vmem:[%s48] ss:$8 sm:$0xf0] %vm45, %v44
    %s50 = scalar_lea.vmem %s0, 4
    %v51 = vld.sshfl [vmem:[%s50] sm:$0xff pattern:$0xb3a29180]
    %52 = vrot.lane.b32.xlu0 %v51, 112
    %v53 = vpop.permute.xlu0 %52
    %vm54 = vcmask 130048
    %s55 = scalar_lea.vmem [#allocation0], 65
    %56 = vst.msk [vmem:[%s55] ss:$8 sm:$0xf] %vm54, %v53
    %s57 = scalar_lea.vmem [#allocation0], 65
    %58 = vst.msk [vmem:[%s57] ss:$8 sm:$0xf0] %vm54, %v53
    %s59 = scalar_lea.vmem %s0, 16
    %v60 = vld.sshfl [vmem:[%s59] sm:$0xff pattern:$0xb3a29180]
    %61 = vrot.lane.b32.xlu0 %v60, 112
    %v62 = vpop.permute.xlu0 %61
    %vm63 = vcmask 130048
    %s64 = scalar_lea.vmem [#allocation0], 129
    %65 = vst.msk [vmem:[%s64] ss:$8 sm:$0xf] %vm63, %v62
    %s66 = scalar_lea.vmem [#allocation0], 129
    %67 = vst.msk [vmem:[%s66] ss:$8 sm:$0xf0] %vm63, %v62
    %s68 = scalar_lea.vmem %s0, 20
    %v69 = vld.sshfl [vmem:[%s68] sm:$0xff pattern:$0xb3a29180]
    %70 = vrot.lane.b32.xlu0 %v69, 112
    %v71 = vpop.permute.xlu0 %70
    %vm72 = vcmask 130048
    %s73 = scalar_lea.vmem [#allocation0], 193
    %74 = vst.msk [vmem:[%s73] ss:$8 sm:$0xf] %vm72, %v71
    %s75 = scalar_lea.vmem [#allocation0], 193
    %76 = vst.msk [vmem:[%s75] ss:$8 sm:$0xf0] %vm72, %v71
    %v77 = vld.sshfl [vmem:[%s0] sm:$0xff pattern:$0xb3a29180]
    %78 = vrot.lane.b32.xlu0 %v77, 96
    %v79 = vpop.permute.xlu0 %78
    %vm80 = vcmask 130048
    %s81 = scalar_lea.vmem [#allocation0], 2
    %82 = vst.msk [vmem:[%s81] ss:$8 sm:$0xf] %vm80, %v79
    %s83 = scalar_lea.vmem [#allocation0], 2
    %84 = vst.msk [vmem:[%s83] ss:$8 sm:$0xf0] %vm80, %v79
    %s85 = scalar_lea.vmem %s0, 4
    %v86 = vld.sshfl [vmem:[%s85] sm:$0xff pattern:$0xb3a29180]
    %87 = vrot.lane.b32.xlu0 %v86, 96
    %v88 = vpop.permute.xlu0 %87
    %vm89 = vcmask 130048
    %s90 = scalar_lea.vmem [#allocation0], 66
    %91 = vst.msk [vmem:[%s90] ss:$8 sm:$0xf] %vm89, %v88
    %s92 = scalar_lea.vmem [#allocation0], 66
    %93 = vst.msk [vmem:[%s92] ss:$8 sm:$0xf0] %vm89, %v88
    %s94 = scalar_lea.vmem %s0, 16
    %v95 = vld.sshfl [vmem:[%s94] sm:$0xff pattern:$0xb3a29180]
    %96 = vrot.lane.b32.xlu0 %v95, 96
    %v97 = vpop.permute.xlu0 %96
    %vm98 = vcmask 130048
    %s99 = scalar_lea.vmem [#allocation0], 130
    %100 = vst.msk [vmem:[%s99] ss:$8 sm:$0xf] %vm98, %v97
    %s101 = scalar_lea.vmem [#allocation0], 130
    %102 = vst.msk [vmem:[%s101] ss:$8 sm:$0xf0] %vm98, %v97
    %s103 = scalar_lea.vmem %s0, 20
    %v104 = vld.sshfl [vmem:[%s103] sm:$0xff pattern:$0xb3a29180]
    %105 = vrot.lane.b32.xlu0 %v104, 96
    %v106 = vpop.permute.xlu0 %105
    %vm107 = vcmask 130048
    %s108 = scalar_lea.vmem [#allocation0], 194
    %109 = vst.msk [vmem:[%s108] ss:$8 sm:$0xf] %vm107, %v106
    %s110 = scalar_lea.vmem [#allocation0], 194
    %111 = vst.msk [vmem:[%s110] ss:$8 sm:$0xf0] %vm107, %v106
    %v112 = vld.sshfl [vmem:[%s0] sm:$0xff pattern:$0xb3a29180]
    %113 = vrot.lane.b32.xlu0 %v112, 80
    %v114 = vpop.permute.xlu0 %113
    %vm115 = vcmask 130048
    %s116 = scalar_lea.vmem [#allocation0], 3
    %117 = vst.msk [vmem:[%s116] ss:$8 sm:$0xf] %vm115, %v114
    %s118 = scalar_lea.vmem [#allocation0], 3
    %119 = vst.msk [vmem:[%s118] ss:$8 sm:$0xf0] %vm115, %v114
    %s120 = scalar_lea.vmem %s0, 4
    %v121 = vld.sshfl [vmem:[%s120] sm:$0xff pattern:$0xb3a29180]
    %122 = vrot.lane.b32.xlu0 %v121, 80
    %v123 = vpop.permute.xlu0 %122
    %vm124 = vcmask 130048
    %s125 = scalar_lea.vmem [#allocation0], 67
    %126 = vst.msk [vmem:[%s125] ss:$8 sm:$0xf] %vm124, %v123
    %s127 = scalar_lea.vmem [#allocation0], 67
    %128 = vst.msk [vmem:[%s127] ss:$8 sm:$0xf0] %vm124, %v123
    %s129 = scalar_lea.vmem %s0, 16
    %v130 = vld.sshfl [vmem:[%s129] sm:$0xff pattern:$0xb3a29180]
    %131 = vrot.lane.b32.xlu0 %v130, 80
    %v132 = vpop.permute.xlu0 %131
    %vm133 = vcmask 130048
    %s134 = scalar_lea.vmem [#allocation0], 131
    %135 = vst.msk [vmem:[%s134] ss:$8 sm:$0xf] %vm133, %v132
    %s136 = scalar_lea.vmem [#allocation0], 131
    %137 = vst.msk [vmem:[%s136] ss:$8 sm:$0xf0] %vm133, %v132
    %s138 = scalar_lea.vmem %s0, 20
    %v139 = vld.sshfl [vmem:[%s138] sm:$0xff pattern:$0xb3a29180]
    %140 = vrot.lane.b32.xlu0 %v139, 80
    %v141 = vpop.permute.xlu0 %140
    %vm142 = vcmask 130048
    %s143 = scalar_lea.vmem [#allocation0], 195
    %144 = vst.msk [vmem:[%s143] ss:$8 sm:$0xf] %vm142, %v141
    %s145 = scalar_lea.vmem [#allocation0], 195
    %146 = vst.msk [vmem:[%s145] ss:$8 sm:$0xf0] %vm142, %v141
    %v147 = vld.sshfl [vmem:[%s0] sm:$0xff pattern:$0xb3a29180]
    %148 = vrot.lane.b32.xlu0 %v147, 64
    %v149 = vpop.permute.xlu0 %148
    %vm150 = vcmask 130048
    %s151 = scalar_lea.vmem [#allocation0], 4
    %152 = vst.msk [vmem:[%s151] ss:$8 sm:$0xf] %vm150, %v149
    %s153 = scalar_lea.vmem [#allocation0], 4
    %154 = vst.msk [vmem:[%s153] ss:$8 sm:$0xf0] %vm150, %v149
    %s155 = scalar_lea.vmem %s0, 4
    %v156 = vld.sshfl [vmem:[%s155] sm:$0xff pattern:$0xb3a29180]
    %157 = vrot.lane.b32.xlu0 %v156, 64
    %v158 = vpop.permute.xlu0 %157
    %vm159 = vcmask 130048
    %s160 = scalar_lea.vmem [#allocation0], 68
    %161 = vst.msk [vmem:[%s160] ss:$8 sm:$0xf] %vm159, %v158
    %s162 = scalar_lea.vmem [#allocation0], 68
    %163 = vst.msk [vmem:[%s162] ss:$8 sm:$0xf0] %vm159, %v158
    %s164 = scalar_lea.vmem %s0, 16
    %v165 = vld.sshfl [vmem:[%s164] sm:$0xff pattern:$0xb3a29180]
    %166 = vrot.lane.b32.xlu0 %v165, 64
    %v167 = vpop.permute.xlu0 %166
    %vm168 = vcmask 130048
    %s169 = scalar_lea.vmem [#allocation0], 132
    %170 = vst.msk [vmem:[%s169] ss:$8 sm:$0xf] %vm168, %v167
    %s171 = scalar_lea.vmem [#allocation0], 132
    %172 = vst.msk [vmem:[%s171] ss:$8 sm:$0xf0] %vm168, %v167
    %s173 = scalar_lea.vmem %s0, 20
    %v174 = vld.sshfl [vmem:[%s173] sm:$0xff pattern:$0xb3a29180]
    %175 = vrot.lane.b32.xlu0 %v174, 64
    %v176 = vpop.permute.xlu0 %175
    %vm177 = vcmask 130048
    %s178 = scalar_lea.vmem [#allocation0], 196
    %179 = vst.msk [vmem:[%s178] ss:$8 sm:$0xf] %vm177, %v176
    %s180 = scalar_lea.vmem [#allocation0], 196
    %181 = vst.msk [vmem:[%s180] ss:$8 sm:$0xf0] %vm177, %v176
    %v182 = vld.sshfl [vmem:[%s0] sm:$0xff pattern:$0xb3a29180]
    %183 = vrot.lane.b32.xlu0 %v182, 48
    %v184 = vpop.permute.xlu0 %183
    %vm185 = vcmask 130048
    %s186 = scalar_lea.vmem [#allocation0], 5
    %187 = vst.msk [vmem:[%s186] ss:$8 sm:$0xf] %vm185, %v184
    %s188 = scalar_lea.vmem [#allocation0], 5
    %189 = vst.msk [vmem:[%s188] ss:$8 sm:$0xf0] %vm185, %v184
    %s190 = scalar_lea.vmem %s0, 4
    %v191 = vld.sshfl [vmem:[%s190] sm:$0xff pattern:$0xb3a29180]
    %192 = vrot.lane.b32.xlu0 %v191, 48
    %v193 = vpop.permute.xlu0 %192
    %vm194 = vcmask 130048
    %s195 = scalar_lea.vmem [#allocation0], 69
    %196 = vst.msk [vmem:[%s195] ss:$8 sm:$0xf] %vm194, %v193
    %s197 = scalar_lea.vmem [#allocation0], 69
    %198 = vst.msk [vmem:[%s197] ss:$8 sm:$0xf0] %vm194, %v193
    %s199 = scalar_lea.vmem %s0, 16
    %v200 = vld.sshfl [vmem:[%s199] sm:$0xff pattern:$0xb3a29180]
    %201 = vrot.lane.b32.xlu0 %v200, 48
    %v202 = vpop.permute.xlu0 %201
    %vm203 = vcmask 130048
    %s204 = scalar_lea.vmem [#allocation0], 133
    %205 = vst.msk [vmem:[%s204] ss:$8 sm:$0xf] %vm203, %v202
    %s206 = scalar_lea.vmem [#allocation0], 133
    %207 = vst.msk [vmem:[%s206] ss:$8 sm:$0xf0] %vm203, %v202
    %s208 = scalar_lea.vmem %s0, 20
    %v209 = vld.sshfl [vmem:[%s208] sm:$0xff pattern:$0xb3a29180]
    %210 = vrot.lane.b32.xlu0 %v209, 48
    %v211 = vpop.permute.xlu0 %210
    %vm212 = vcmask 130048
    %s213 = scalar_lea.vmem [#allocation0], 197
    %214 = vst.msk [vmem:[%s213] ss:$8 sm:$0xf] %vm212, %v211
    %s215 = scalar_lea.vmem [#allocation0], 197
    %216 = vst.msk [vmem:[%s215] ss:$8 sm:$0xf0] %vm212, %v211
    %v217 = vld.sshfl [vmem:[%s0] sm:$0xff pattern:$0xb3a29180]
    %218 = vrot.lane.b32.xlu0 %v217, 32
    %v219 = vpop.permute.xlu0 %218
    %vm220 = vcmask 130048
    %s221 = scalar_lea.vmem [#allocation0], 6
    %222 = vst.msk [vmem:[%s221] ss:$8 sm:$0xf] %vm220, %v219
    %s223 = scalar_lea.vmem [#allocation0], 6
    %224 = vst.msk [vmem:[%s223] ss:$8 sm:$0xf0] %vm220, %v219
    %s225 = scalar_lea.vmem %s0, 4
    %v226 = vld.sshfl [vmem:[%s225] sm:$0xff pattern:$0xb3a29180]
    %227 = vrot.lane.b32.xlu0 %v226, 32
    %v228 = vpop.permute.xlu0 %227
    %vm229 = vcmask 130048
    %s230 = scalar_lea.vmem [#allocation0], 70
    %231 = vst.msk [vmem:[%s230] ss:$8 sm:$0xf] %vm229, %v228
    %s232 = scalar_lea.vmem [#allocation0], 70
    %233 = vst.msk [vmem:[%s232] ss:$8 sm:$0xf0] %vm229, %v228
    %s234 = scalar_lea.vmem %s0, 16
    %v235 = vld.sshfl [vmem:[%s234] sm:$0xff pattern:$0xb3a29180]
    %236 = vrot.lane.b32.xlu0 %v235, 32
    %v237 = vpop.permute.xlu0 %236
    %vm238 = vcmask 130048
    %s239 = scalar_lea.vmem [#allocation0], 134
    %240 = vst.msk [vmem:[%s239] ss:$8 sm:$0xf] %vm238, %v237
    %s241 = scalar_lea.vmem [#allocation0], 134
    %242 = vst.msk [vmem:[%s241] ss:$8 sm:$0xf0] %vm238, %v237
    %s243 = scalar_lea.vmem %s0, 20
    %v244 = vld.sshfl [vmem:[%s243] sm:$0xff pattern:$0xb3a29180]
    %245 = vrot.lane.b32.xlu0 %v244, 32
    %v246 = vpop.permute.xlu0 %245
    %vm247 = vcmask 130048
    %s248 = scalar_lea.vmem [#allocation0], 198
    %249 = vst.msk [vmem:[%s248] ss:$8 sm:$0xf] %vm247, %v246
    %s250 = scalar_lea.vmem [#allocation0], 198
    %251 = vst.msk [vmem:[%s250] ss:$8 sm:$0xf0] %vm247, %v246
    %v252 = vld.sshfl [vmem:[%s0] sm:$0xff pattern:$0xb3a29180]
    %253 = vrot.lane.b32.xlu0 %v252, 16
    %v254 = vpop.permute.xlu0 %253
    %vm255 = vcmask 130048
    %s256 = scalar_lea.vmem [#allocation0], 7
    %257 = vst.msk [vmem:[%s256] ss:$8 sm:$0xf] %vm255, %v254
    %s258 = scalar_lea.vmem [#allocation0], 7
    %259 = vst.msk [vmem:[%s258] ss:$8 sm:$0xf0] %vm255, %v254
    %s260 = scalar_lea.vmem %s0, 4
    %v261 = vld.sshfl [vmem:[%s260] sm:$0xff pattern:$0xb3a29180]
    %262 = vrot.lane.b32.xlu0 %v261, 16
    %v263 = vpop.permute.xlu0 %262
    %vm264 = vcmask 130048
    %s265 = scalar_lea.vmem [#allocation0], 71
    %266 = vst.msk [vmem:[%s265] ss:$8 sm:$0xf] %vm264, %v263
    %s267 = scalar_lea.vmem [#allocation0], 71
    %268 = vst.msk [vmem:[%s267] ss:$8 sm:$0xf0] %vm264, %v263
    %s269 = scalar_lea.vmem %s0, 16
    %v270 = vld.sshfl [vmem:[%s269] sm:$0xff pattern:$0xb3a29180]
    %271 = vrot.lane.b32.xlu0 %v270, 16
    %v272 = vpop.permute.xlu0 %271
    %vm273 = vcmask 130048
    %s274 = scalar_lea.vmem [#allocation0], 135
    %275 = vst.msk [vmem:[%s274] ss:$8 sm:$0xf] %vm273, %v272
    %s276 = scalar_lea.vmem [#allocation0], 135
    %277 = vst.msk [vmem:[%s276] ss:$8 sm:$0xf0] %vm273, %v272
    %s278 = scalar_lea.vmem %s0, 20
    %v279 = vld.sshfl [vmem:[%s278] sm:$0xff pattern:$0xb3a29180]
    %280 = vrot.lane.b32.xlu0 %v279, 16
    %v281 = vpop.permute.xlu0 %280
    %vm282 = vcmask 130048
    %s283 = scalar_lea.vmem [#allocation0], 199
    %284 = vst.msk [vmem:[%s283] ss:$8 sm:$0xf] %vm282, %v281
    %s285 = scalar_lea.vmem [#allocation0], 199
    %286 = vst.msk [vmem:[%s285] ss:$8 sm:$0xf0] %vm282, %v281
    %s288 = ssub.s32 4096, 4096
    %289 = vsyncadd [#allocation1], %s288
    %s291 = sshll.u32 [#allocation0], 4
    %s292 = int_to_ptr.vmem [resolvable:$true] %s291
    %294 = dma.vmem_to_hbm [thread:$0]  %s292, 4096, %s1, [#allocation1]
    %295 = dma.done [#allocation1], 4096
    %296 = vsyncpa [#allocation1], 1

</llo_original>
